<compile_context>
chip_gen: v6e
topology: v6e:2x2x1
jax: 0.10.0
libtpu: 0.0.40
codegen_flags: <defaults>
</compile_context>

<pallas_src>
import functools

import jax
import jax.numpy as jnp
from jax.experimental import pallas as pl
from jax.experimental.pallas import tpu as pltpu

# Per-grid-step pipeline overhead is ~0.35us; target enough HBM traffic per
# step that the DMA time comfortably exceeds it on all generations.
_TARGET_STEP_BYTES = 4 * 1024 * 1024


def _outconv_kernel(x_ref, w_ref, b_ref, o_ref):
    """One grid step: sigmoid(W @ x + b) for a (NB, C_in, TS) block."""
    # x_ref: (NB, C_in, TS)   channels on sublanes, spatial on the lane axis
    # w_ref: (C_out, C_in)    1x1 conv weights (tiny, VMEM-resident)
    # b_ref: (C_out, 1)       bias column, broadcast over lanes
    # o_ref: (NB, C_out, TS)  lane-dense output block (TS multiple of 128)
    w = w_ref[...]
    b = b_ref[...]

    # Per-batch-element matmul keeps the result directly in the (C_out, TS)
    # layout (C_out on sublanes, spatial on lanes) -- no in-VMEM transpose --
    # and the scf.for bounds live ranges even for large batch blocks.
    @pl.loop(0, x_ref.shape[0])
    def _(i):
        y = jnp.dot(w, x_ref[i], preferred_element_type=jnp.float32) + b
        # Exact sigmoid: the exp goes to the EUP slot; the single f32 divide
        # is nowhere near the binding slot of this HBM-bound kernel.
        o_ref[i] = (1.0 / (1.0 + jnp.exp(-y))).astype(o_ref.dtype)


def _per_core_vmem_working_budget():
    """(working-set budget, physical VMEM) per TensorCore, in bytes."""
    phys = None
    try:
        phys = pltpu.get_tpu_info().vmem_capacity_bytes
    except Exception:
        try:
            kind = jax.devices()[0].device_kind.lower()
            phys = 64 * 1024 * 1024 if "v7" in kind else 128 * 1024 * 1024
        except Exception:
            phys = 64 * 1024 * 1024  # most conservative (v7x per-TC)
    # Both grid axes are "parallel", so on v7x each TensorCore runs its own
    # double-buffered pipeline out of its 64 MiB: keep the working set near
    # ~22 MiB there and ~44 MiB on the 128 MiB parts (v5e / v6e).
    if phys <= 80 * 1024 * 1024:
        return 22 * 1024 * 1024, phys
    return 44 * 1024 * 1024, phys


def _working_set_bytes(nb, tile_s, c_in, c_out):
    # Double-buffered f32 input + output blocks, plus one (C_out, tile_s) f32
    # matmul intermediate live inside the per-batch loop.  Weight/bias blocks
    # are negligible.
    return nb * tile_s * 2 * (c_in + c_out) * 4 + tile_s * c_out * 4


def _pick_tiles(n, c_in, c_out, hw):
    """Pick (batch_block, spatial_tile) so each grid step moves multi-MiB."""
    budget, _ = _per_core_vmem_working_budget()
    hw_cap = pl.cdiv(hw, 128) * 128           # rounded-up spatial extent

    # Largest spatial (lane-axis) tile for one batch element under the per-TC
    # budget.  No artificial small cap: multi-MiB steps are the whole point.
    per_col = 2 * (c_in + c_out) * 4 + c_out * 4
    t_max = max(128, (budget // per_col) // 128 * 128)
    tile_s = min(hw_cap, t_max)
    spatial_steps = pl.cdiv(hw_cap, tile_s)

    # Small images: block the batch axis too so one step still reaches the
    # per-step traffic target (a 16x16, 4->8 channel image is only ~12 KiB).
    traffic_per_b = tile_s * (c_in + c_out) * 4
    nb = pl.cdiv(_TARGET_STEP_BYTES, max(traffic_per_b, 1))
    nb_vmem = max(1, budget // max(tile_s * per_col, 1))
    nb = int(max(1, min(n, nb, nb_vmem)))

    # Don't collapse a large batch into a single grid step: keep some batch
    # steps so the DMA pipeline overlaps and megacore has work to shard.
    if spatial_steps == 1 and n >= 4:
        nb = min(nb, max(1, n // 4))
    return nb, tile_s


def _vmem_limit_bytes(nb, tile_s, c_in, c_out):
    """Explicit scoped-VMEM limit: the defaults (16 MiB on v5e, 32 MiB on
    v6e/v7x) are far below physical capacity and would cap the large tiles."""
    _, phys = _per_core_vmem_working_budget()
    working = _working_set_bytes(nb, tile_s, c_in, c_out)
    limit = max(32 * 1024 * 1024, working + working // 2 + (2 << 20))
    return int(min(limit, max(phys - (8 << 20), 32 * 1024 * 1024)))


@functools.partial(jax.jit, static_argnames=("tile_s", "batch_block"))
def out_conv(x_nchw, weight, bias, *, tile_s=None, batch_block=None):
    """1x1 conv + sigmoid, matching nn.Conv2d(k=1) -> nn.Sigmoid().

    x_nchw:  (N, C_in, H, W)     float32
    weight:  (C_out, C_in, 1, 1) float32  (PyTorch Conv2d layout)
    bias:    (C_out,)            float32
    returns: (N, C_out, H, W)    float32
    """
    N, C_in, H, W = x_nchw.shape
    C_out = weight.shape[0]
    HW = H * W

    x = x_nchw.reshape(N, C_in, HW)        # zero-copy view, no transpose
    w_mat = weight.reshape(C_out, C_in)    # (C_out, C_in)
    b_col = bias.reshape(C_out, 1)         # broadcasts over lanes

    auto_nb, auto_ts = _pick_tiles(N, C_in, C_out, HW)
    hw_cap = pl.cdiv(HW, 128) * 128
    if tile_s is None:
        tile_s = auto_ts
    else:
        # Keep explicit overrides lane-dense and block-legal.
        tile_s = min(max(128, (int(tile_s) // 128) * 128), hw_cap)
    nb = auto_nb if batch_block is None else max(1, min(int(batch_block), N))
    vmem_limit = _vmem_limit_bytes(nb, tile_s, C_in, C_out)

    grid = (pl.cdiv(N, nb), pl.cdiv(HW, tile_s))   # partial blocks masked by Pallas

    y = pl.pallas_call(
        _outconv_kernel,
        out_shape=jax.ShapeDtypeStruct((N, C_out, HW), x_nchw.dtype),
        grid_spec=pltpu.PrefetchScalarGridSpec(
            num_scalar_prefetch=0,
            grid=grid,
            in_specs=[
                pl.BlockSpec((nb, C_in, tile_s), lambda n, s: (n, 0, s)),
                pl.BlockSpec((C_out, C_in), lambda n, s: (0, 0)),
                pl.BlockSpec((C_out, 1), lambda n, s: (0, 0)),
            ],
            out_specs=pl.BlockSpec((nb, C_out, tile_s), lambda n, s: (n, 0, s)),
        ),
        compiler_params=pltpu.CompilerParams(
            # Both axes independent -> shard across TensorCores (v7x megacore).
            dimension_semantics=("parallel", "parallel"),
            vmem_limit_bytes=vmem_limit),
    )(x, w_mat, b_col)

    return y.reshape(N, C_out, H, W)       # zero-copy view back to NCHW


def _init_params(key, in_channels, out_channels):
    # Deterministic init mimicking PyTorch Conv2d defaults (uniform bounds).
    kw, kb = jax.random.split(key)
    fan_in = in_channels * 1 * 1
    bound = 1.0 / (fan_in ** 0.5)
    weight = jax.random.uniform(
        kw, (out_channels, in_channels, 1, 1),
        minval=-bound, maxval=bound, dtype=jnp.float32)
    bias = jax.random.uniform(
        kb, (out_channels,), minval=-bound, maxval=bound, dtype=jnp.float32)
    return weight, bias


def _reference(x, weight, bias):
    c_out, c_in = weight.shape[0], weight.shape[1]
    return jax.nn.sigmoid(
        jnp.einsum("nchw,oc->nohw", x, weight.reshape(c_out, c_in))
        + bias[None, :, None, None])


if __name__ == "__main__":
    key = jax.random.PRNGKey(0)
    k_x, k_p, k_x2, k_p2, k_x3, k_p3 = jax.random.split(key, 6)

    # Primary shape: batch=2, C_in=4 -> C_out=8, 16x16 spatial.
    N, C_in, H, W = 2, 4, 16, 16
    C_out = 8
    x = jax.random.normal(k_x, (N, C_in, H, W), dtype=jnp.float32)
    weight, bias = _init_params(k_p, C_in, C_out)

    out = jax.block_until_ready(out_conv(x, weight, bias))
    ref = _reference(x, weight, bias)
    assert out.shape == (N, C_out, H, W)
    assert jnp.allclose(out, ref, atol=1e-5, rtol=1e-5)

    # Segmentation-head style (C_out=1) with ragged spatial extent (H*W not a
    # multiple of 128): exercises the partial-last-block path with no
    # wrapper-side padding or slicing.
    N2, C_in2, H2, W2, C_out2 = 1, 3, 10, 10, 1
    x2 = jax.random.normal(k_x2, (N2, C_in2, H2, W2), dtype=jnp.float32)
    weight2, bias2 = _init_params(k_p2, C_in2, C_out2)

    out2 = jax.block_until_ready(out_conv(x2, weight2, bias2))
    ref2 = _reference(x2, weight2, bias2)
    assert out2.shape == (N2, C_out2, H2, W2)
    assert jnp.allclose(out2, ref2, atol=1e-5, rtol=1e-5)

    # Explicit overrides: multiple spatial tiles AND multiple batch blocks,
    # with partial last blocks on both grid axes.
    N3, C_in3, H3, W3, C_out3 = 3, 4, 20, 20, 8
    x3 = jax.random.normal(k_x3, (N3, C_in3, H3, W3), dtype=jnp.float32)
    weight3, bias3 = _init_params(k_p3, C_in3, C_out3)

    out3 = jax.block_until_ready(
        out_conv(x3, weight3, bias3, tile_s=128, batch_block=2))
    ref3 = _reference(x3, weight3, bias3)
    assert out3.shape == (N3, C_out3, H3, W3)
    assert jnp.allclose(out3, ref3, atol=1e-5, rtol=1e-5)

    print("KERNEL_OK")
</pallas_src>

<mosaic_0001>
module attributes {stable_mosaic.version = 11 : i64} {
  func.func @_outconv_kernel(%arg0: i32, %arg1: i32, %arg2: memref<2x4x256xf32, #tpu.memory_space<vmem>>, %arg3: memref<8x4xf32, #tpu.memory_space<vmem>>, %arg4: memref<8x1xf32, #tpu.memory_space<vmem>>, %arg5: memref<2x8x256xf32, #tpu.memory_space<vmem>>) attributes {dimension_semantics = [#tpu.dimension_semantics<parallel>, #tpu.dimension_semantics<parallel>], iteration_bounds = array<i64: 1, 1>, scalar_prefetch = 0 : i64, scratch_operands = 0 : i64, tpu.core_type = #tpu.core_type<tc>, window_params = [{transform_indices = @transform_0, window_bounds = array<i64: 2, 4, 256>}, {pipeline_mode = #tpu.pipeline_mode<synchronous>, transform_indices = @transform_1, window_bounds = array<i64: 8, 4>}, {pipeline_mode = #tpu.pipeline_mode<synchronous>, transform_indices = @transform_2, window_bounds = array<i64: 8, 1>}, {transform_indices = @transform_3, window_bounds = array<i64: 2, 8, 256>}]} {
    %c0 = arith.constant 0 : index
    %c0_0 = arith.constant 0 : index
    %0 = vector.load %arg3[%c0, %c0_0] : memref<8x4xf32, #tpu.memory_space<vmem>>, vector<8x4xf32>
    %c0_1 = arith.constant 0 : index
    %c0_2 = arith.constant 0 : index
    %1 = vector.load %arg4[%c0_1, %c0_2] : memref<8x1xf32, #tpu.memory_space<vmem>>, vector<8x1xf32>
    %c0_i32 = arith.constant 0 : i32
    %c2_i32 = arith.constant 2 : i32
    %2 = arith.addi %c0_i32, %c2_i32 : i32
    %c1_i32 = arith.constant 1 : i32
    scf.for %arg6 = %c0_i32 to %2 step %c1_i32  : i32 {
      %c1_i32_4 = arith.constant 1 : i32
      %3 = arith.muli %arg6, %c1_i32_4 : i32
      %c0_i32_5 = arith.constant 0 : i32
      %4 = arith.addi %c0_i32_5, %3 : i32
      %5 = arith.index_cast %4 : i32 to index
      %c0_6 = arith.constant 0 : index
      %c0_7 = arith.constant 0 : index
      %6 = vector.load %arg2[%5, %c0_6, %c0_7] : memref<2x4x256xf32, #tpu.memory_space<vmem>>, vector<1x4x256xf32>
      %7 = vector.shape_cast %6 : vector<1x4x256xf32> to vector<4x256xf32>
      %cst = arith.constant dense<0.000000e+00> : vector<8x256xf32>
      %8 = tpu.matmul %0, %7, %cst {dimension_numbers = #tpu.dot_dimension_numbers<[1], [0], [0], [1], [0, 0, 1, 1], [], []>} : vector<8x4xf32>, vector<4x256xf32>, vector<8x256xf32> -> vector<8x256xf32>
      %9 = vector.broadcast %1 : vector<8x1xf32> to vector<8x256xf32>
      %10 = arith.addf %8, %9 : vector<8x256xf32>
      %cst_8 = arith.constant 0.000000e+00 : f32
      %11 = vector.broadcast %cst_8 : f32 to vector<8x256xf32>
      %12 = arith.subf %11, %10 : vector<8x256xf32>
      %13 = math.exp %12 : vector<8x256xf32>
      %cst_9 = arith.constant 1.000000e+00 : f32
      %14 = vector.broadcast %cst_9 : f32 to vector<8x256xf32>
      %15 = arith.addf %14, %13 : vector<8x256xf32>
      %cst_10 = arith.constant 1.000000e+00 : f32
      %16 = vector.broadcast %cst_10 : f32 to vector<8x256xf32>
      %17 = arith.divf %16, %15 : vector<8x256xf32>
      %18 = arith.index_cast %4 : i32 to index
      %c0_11 = arith.constant 0 : index
      %c0_12 = arith.constant 0 : index
      %19 = vector.load %arg5[%18, %c0_11, %c0_12] : memref<2x8x256xf32, #tpu.memory_space<vmem>>, vector<1x8x256xf32>
      %20 = vector.shape_cast %19 : vector<1x8x256xf32> to vector<8x256xf32>
      %21 = vector.shape_cast %17 : vector<8x256xf32> to vector<1x8x256xf32>
      tpu.vector_store %arg5[%18, %c0_11, %c0_12], %21 {strides = array<i32>} : memref<2x8x256xf32, #tpu.memory_space<vmem>>, vector<1x8x256xf32>,
    }
    %c2_i32_3 = arith.constant 2 : i32
    return
  }
  func.func @transform_0(%arg0: i32, %arg1: i32) -> (i32, i32, i32) {
    %c0_i32 = arith.constant 0 : i32
    %c0_i32_0 = arith.constant 0 : i32
    return %arg0, %c0_i32, %arg1 : i32, i32, i32
  }
  func.func @transform_1(%arg0: i32, %arg1: i32) -> (i32, i32) {
    %c0_i32 = arith.constant 0 : i32
    %c0_i32_0 = arith.constant 0 : i32
    %c0_i32_1 = arith.constant 0 : i32
    return %c0_i32, %c0_i32_0 : i32, i32
  }
  func.func @transform_2(%arg0: i32, %arg1: i32) -> (i32, i32) {
    %c0_i32 = arith.constant 0 : i32
    %c0_i32_0 = arith.constant 0 : i32
    %c0_i32_1 = arith.constant 0 : i32
    return %c0_i32, %c0_i32_0 : i32, i32
  }
  func.func @transform_3(%arg0: i32, %arg1: i32) -> (i32, i32, i32) {
    %c0_i32 = arith.constant 0 : i32
    %c0_i32_0 = arith.constant 0 : i32
    return %arg0, %c0_i32, %arg1 : i32, i32, i32
  }
}

</mosaic_0001>

<llo_original>
// kernel: out_conv.1
$region0: #{out_conv.1}
  #allocation0 [shape = 'u32[]', space=smem, size = 0x4, offset = 0x4, fixed_abs, tag = 'smem constant byte address 0x4 - core index']
  #allocation1 [shape = 'u32[144,128]{1,0:T(1,128)}', space=vmem, size = 0x12000, scoped, tag = 'internal scratch']
  %s0 = inlined_call_operand.vmem [shape: f32[2,4,256], index: 0, kind: input, shape index: {}]
  %s1 = inlined_call_operand.vmem [shape: f32[8,4], index: 1, kind: input, shape index: {}]
  %s2 = inlined_call_operand.vmem [shape: f32[8,1], index: 2, kind: input, shape index: {}]
  %s3 = inlined_call_operand.vmem [shape: f32[2,8,256], index: 3, kind: output, shape index: {}]
  %s4 = sld [smem:[#allocation0]]
  $region29: #{out_conv.1} parent=0
    _
  %s6 = ssub.s32 1, %s4
  %s7 = scalar_select 0, %s6, %s4
  // Predicated region
  $region2: #{out_conv.1} parent=0 // pred_check
    _
  $region3: #{out_conv.1} parent=0 // pred_check_branch
    %9 = sbr.rel (0) target = $region5
  $region4: #{out_conv.1} parent=0 // pred_region
    _
  $region5: #{out_conv.1} parent=0 // pred_fallthru
    _
  // Predicated region
  $region6: #{out_conv.1} parent=0 // pred_check
    _
  $region7: #{out_conv.1} parent=0 // pred_check_branch
    %11 = sbr.rel (0) target = $region9
  $region8: #{out_conv.1} parent=0 // pred_region
    _
  $region9: #{out_conv.1} parent=0 // pred_fallthru
    _
  // Predicated region
  $region10: #{out_conv.1} parent=0 // pred_check
    _
  $region11: #{out_conv.1} parent=0 // pred_check_branch
    %13 = sbr.rel (0) target = $region13
  $region12: #{out_conv.1} parent=0 // pred_region
    _
  $region13: #{out_conv.1} parent=0 // pred_fallthru
    _
  %v14 = vld [vmem:[%s1] sm:$0xff]
  %v15 = vld [vmem:[%s2] sm:$0xff]
  loop: start=0, step=1, limit=2
  $region14: #{out_conv.1} parent=0 // loop_pre_header
    _
  $region15: #{out_conv.1} parent=0 // loop_header
    %s17 = sphi 0, %s21
    %p18 = scmp.ge.s32.totalorder %s17, 2
  $region16: #{out_conv.1} parent=0 // loop_header_branch
    %20 = sbr.rel (%p18) target = $region20
  $region17: #{out_conv.1} parent=0 // loop_body
    %s22 = smul.u32 %s17, 2
    %s23 = smul.addr %s22, 4
    %s24 = scalar_lea.vmem %s0, %s23
    %v25 = vld [vmem:[%s24] sm:$0xff]
    %27 = vset.pattern.permute.xlu0 0
    %28 = vperm.xlu0 %27, %v15
    %v29 = vpop.permute.xlu0 %28
    %v32 = vcombine.high %v25, %v25
    %vm33 = vcmask 31744
    %v35 = vsel %vm33, %v14, 0
    %vm37 = vcmask 1043456
    %v38 = vsel %vm37, %v25, 0
    %v40 = vsel %vm37, %v32, 0
    %42 = vmatprep.subr.mxu0 0.0
    %43 = vmatpush1.msra.mxu0 0.0
    %44 = vmatprep.subr.mxu0 0.0
    %45 = vmatpush1.msra.mxu0 0.0
    %46 = vmatprep.subr.mxu0 0.0
    %47 = vmatpush1.msra.mxu0 0.0
    %48 = vmatprep.subr.mxu0 0.0
    %49 = vmatpush1.msra.mxu0 0.0
    %50 = vmatprep.subr.mxu0 0.0
    %51 = vmatpush1.msra.mxu0 0.0
    %52 = vmatprep.subr.mxu0 0.0
    %53 = vmatpush1.msra.mxu0 0.0
    %54 = vmatprep.subr.mxu0 0.0
    %55 = vmatpush1.msra.mxu0 0.0
    %56 = vmatprep.subr.mxu0 0.0
    %57 = vmatpush1.msra.mxu0 0.0
    %58 = vmatprep.subr.mxu0 0.0
    %59 = vmatpush1.msra.mxu0 0.0
    %60 = vmatprep.subr.mxu0 0.0
    %61 = vmatpush1.msra.mxu0 0.0
    %62 = vmatprep.subr.mxu0 0.0
    %63 = vmatpush1.msra.mxu0 0.0
    %64 = vmatprep.subr.mxu0 0.0
    %65 = vmatpush1.msra.mxu0 0.0
    %66 = vmatprep.subr.mxu0 0.0
    %67 = vmatpush1.msra.mxu0 0.0
    %68 = vmatprep.subr.mxu0 0.0
    %69 = vmatpush1.msra.mxu0 0.0
    %70 = vmatprep.subr.mxu0 0.0
    %71 = vmatpush1.msra.mxu0 0.0
    %72 = vmatprep.subr.mxu0 %v40
    %73 = vmatpush1.msra.mxu0 %v38
    %74 = vmatprep.subr.mxu0 0.0
    %75 = vmatpush2.msra.mxu0 0.0
    %76 = vmatprep.subr.mxu0 0.0
    %77 = vmatpush2.msra.mxu0 0.0
    %78 = vmatprep.subr.mxu0 0.0
    %79 = vmatpush2.msra.mxu0 0.0
    %80 = vmatprep.subr.mxu0 0.0
    %81 = vmatpush2.msra.mxu0 0.0
    %82 = vmatprep.subr.mxu0 0.0
    %83 = vmatpush2.msra.mxu0 0.0
    %84 = vmatprep.subr.mxu0 0.0
    %85 = vmatpush2.msra.mxu0 0.0
    %86 = vmatprep.subr.mxu0 0.0
    %87 = vmatpush2.msra.mxu0 0.0
    %88 = vmatprep.subr.mxu0 0.0
    %89 = vmatpush2.msra.mxu0 0.0
    %90 = vmatprep.subr.mxu0 0.0
    %91 = vmatpush2.msra.mxu0 0.0
    %92 = vmatprep.subr.mxu0 0.0
    %93 = vmatpush2.msra.mxu0 0.0
    %94 = vmatprep.subr.mxu0 0.0
    %95 = vmatpush2.msra.mxu0 0.0
    %96 = vmatprep.subr.mxu0 0.0
    %97 = vmatpush2.msra.mxu0 0.0
    %98 = vmatprep.subr.mxu0 0.0
    %99 = vmatpush2.msra.mxu0 0.0
    %100 = vmatprep.subr.mxu0 0.0
    %101 = vmatpush2.msra.mxu0 0.0
    %102 = vmatprep.subr.mxu0 0.0
    %103 = vmatpush2.msra.mxu0 0.0
    %104 = vmatprep.subr.mxu0 0.0
    %105 = vmatpush2.msra.mxu0 0.0
    %106 = vmatprep.mubr.f32.mxu0 0.0
    %107 = vmatmul.mubr.f32.gmra.mxu0 %v35
    %v108 = vpop.f32.mrf.mxu0
    %v109 = vadd.f32 %v29, %v108
    %v110 = vpop.f32.mrf.mxu0
    %v111 = vadd.f32 %v29, %v110
    %112 = vdwg.mxu0
    %v113 = vsub.f32 0.0, %v109
    %v114 = vsub.f32 0.0, %v111
    %v115 = vmul.f32 %v113, 1.442695
    %v116 = vpow.pop %v115
    %v117 = vmul.f32 %v114, 1.442695
    %v118 = vpow.pop %v117
    %v119 = vadd.f32 %v116, 1.0
    %v120 = vadd.f32 %v118, 1.0
    %v121 = vrcp.pop %v119
    %v122 = vmul.f32 1.0, %v121
    %v123 = vrcp.pop %v120
    %v124 = vmul.f32 1.0, %v123
    %s125 = smul.addr %s22, 8
    %s126 = scalar_lea.vmem %s3, %s125
    %127 = vst [vmem:[%s126] sm:$0xff] %v122
    %128 = vst [vmem:[%s126 + $0x8] sm:$0xff] %v124
  $region18: #{out_conv.1} parent=0 // loop_footer
    %s21 = sadd.s32 1, %s17
  $region19: #{out_conv.1} parent=0 // loop_footer_branch
    %16 = sbr.rel target = $region15
  $region20: #{out_conv.1} parent=0 // loop_exit
    _
  // Predicated region
  $region21: #{out_conv.1} parent=0 // pred_check
    _
  $region22: #{out_conv.1} parent=0 // pred_check_branch
    %130 = sbr.rel (0) target = $region24
  $region23: #{out_conv.1} parent=0 // pred_region
    _
  $region24: #{out_conv.1} parent=0 // pred_fallthru
    _
  // Predicated region
  $region25: #{out_conv.1} parent=0 // pred_check
    _
  $region26: #{out_conv.1} parent=0 // pred_check_branch
    %132 = sbr.rel (0) target = $region28
  $region27: #{out_conv.1} parent=0 // pred_region
    _
  $region28: #{out_conv.1} parent=0 // pred_fallthru
    _

</llo_original>
